<compile_context>
chip_gen: v6e
topology: v6e:2x2x1
jax: 0.10.0
libtpu: 0.0.40
codegen_flags: <defaults>
</compile_context>

<pallas_src>
import functools

import jax
import jax.numpy as jnp
from jax.experimental import pallas as pl
from jax.experimental.pallas import tpu as pltpu


def _accumulate(p, g, m, out_ref, h_tile, h_total):
    """Accumulate masked partial sums of one (tH, W) block into out_ref (3, W)."""
    tH, _ = p.shape

    if h_total % h_tile != 0:
        # The last H-tile overruns the array: Pallas pads the block with
        # unspecified data (possibly NaN/Inf bit patterns).  Zero every input
        # in the invalid rows so no garbage/NaN can reach the sums.
        row = (jax.lax.broadcasted_iota(jnp.int32, (tH, 1), 0)
               + pl.program_id(1) * h_tile)
        valid = row < h_total
        p = jnp.where(valid, p, 0.0)
        g = jnp.where(valid, g, 0.0)
        m = jnp.where(valid, m, 0.0)

    @pl.when(pl.program_id(1) == 0)
    def _():
        out_ref[...] = jnp.zeros(out_ref.shape, out_ref.dtype)

    pm = p * m                      # reuse products: 3 muls/elem
    gm = g * m
    out_ref[0:1, :] += jnp.sum(pm * g, axis=0, keepdims=True)   # intersection
    out_ref[1:2, :] += jnp.sum(pm, axis=0, keepdims=True)       # sum(pred*mask)
    out_ref[2:3, :] += jnp.sum(gm, axis=0, keepdims=True)       # sum(gt*mask)


def _dice_kernel(h_tile, h_total, pred_ref, gt_ref, mask_ref, out_ref):
    _accumulate(pred_ref[...].astype(jnp.float32),
                gt_ref[...].astype(jnp.float32),
                mask_ref[...].astype(jnp.float32),
                out_ref, h_tile, h_total)


def _dice_kernel_weighted(h_tile, h_total, pred_ref, gt_ref, mask_ref, w_ref,
                          out_ref):
    m = mask_ref[...].astype(jnp.float32) * w_ref[...].astype(jnp.float32)
    _accumulate(pred_ref[...].astype(jnp.float32),
                gt_ref[...].astype(jnp.float32),
                m, out_ref, h_tile, h_total)


def dice_loss(pred, gt, mask, weights=None, *, eps=1e-6,
              max_block_rows=1024, target_block_bytes=2 * 1024 * 1024):
    """Pallas implementation of DiceLoss.forward.

    pred / gt: (N, 1, H, W) or (N, H, W); mask / weights: (N, H, W).
    Returns a scalar f32 loss. Inputs are streamed in their native layout and
    dtype (no wrapper-side pad/reshape/upcast).
    """
    def logical_shape(x):
        return (x.shape[0],) + x.shape[-2:] if x.ndim == 4 else x.shape

    n, h, w = logical_shape(pred)
    assert logical_shape(gt) == (n, h, w)
    assert logical_shape(mask) == (n, h, w)
    if weights is not None:
        assert logical_shape(weights) == (n, h, w)

    # Row tile: multiple of 8, sized so one f32 input block is ~target bytes.
    t_cap = max(8, min(max_block_rows, (target_block_bytes // (4 * w)) // 8 * 8))
    t_h = h if h <= t_cap else t_cap          # h <= cap: one exact block, no mask
    n_h = -(-h // t_h)

    def make_spec(x):
        if x.ndim == 4:                        # (N, 1, H, W): squeeze N and C dims
            return pl.BlockSpec((None, None, t_h, w), lambda i, j: (i, 0, j, 0))
        return pl.BlockSpec((None, t_h, w), lambda i, j: (i, j, 0))

    inputs = [pred, gt, mask]
    if weights is not None:
        inputs.append(weights)                 # fused weights*mask in-kernel
        kernel = functools.partial(_dice_kernel_weighted, t_h, h)
    else:
        kernel = functools.partial(_dice_kernel, t_h, h)

    partials = pl.pallas_call(
        kernel,
        out_shape=jax.ShapeDtypeStruct((n, 3, w), jnp.float32),
        grid_spec=pltpu.PrefetchScalarGridSpec(
            num_scalar_prefetch=0,
            grid=(n, n_h),
            in_specs=[make_spec(x) for x in inputs],
            # Per-batch accumulator block, resident across the H-tile axis.
            out_specs=pl.BlockSpec((None, 3, w), lambda i, j: (i, 0, 0)),
        ),
        compiler_params=pltpu.CompilerParams(
            dimension_semantics=("parallel", "arbitrary"),
            vmem_limit_bytes=48 * 1024 * 1024,
        ),
    )(*inputs)

    # Tiny final combine: (N, 3, W) partial sums -> scalar loss.
    sums = jnp.sum(partials, axis=(0, 2))
    inter, psum, gsum = sums[0], sums[1], sums[2]
    union = psum + gsum + eps
    return 1.0 - 2.0 * inter / union


def _ref_dice_loss(pred, gt, mask, weights=None, eps=1e-6):
    if pred.ndim == 4:
        pred = pred[:, 0, :, :]
        gt = gt[:, 0, :, :]
    if weights is not None:
        mask = weights * mask
    pred = pred.astype(jnp.float32)
    gt = gt.astype(jnp.float32)
    mask = mask.astype(jnp.float32)
    inter = jnp.sum(pred * gt * mask)
    union = jnp.sum(pred * mask) + jnp.sum(gt * mask) + eps
    return 1.0 - 2.0 * inter / union


if __name__ == "__main__":
    key = jax.random.PRNGKey(0)
    ks = jax.random.split(key, 10)

    # Case 1: (N, 1, H, W) pred/gt with weights; gt/mask streamed as bf16
    # (0/1 values, exactly representable) to exercise the narrow-dtype path.
    N, H, W = 2, 16, 16
    pred = jax.nn.sigmoid(jax.random.normal(ks[0], (N, 1, H, W), jnp.float32))
    gt = (jax.random.uniform(ks[1], (N, 1, H, W)) > 0.5).astype(jnp.bfloat16)
    mask = (jax.random.uniform(ks[2], (N, H, W)) > 0.2).astype(jnp.bfloat16)
    weights = jax.random.uniform(ks[3], (N, H, W), jnp.float32)

    loss1 = jax.block_until_ready(dice_loss(pred, gt, mask, weights))
    ref1 = _ref_dice_loss(pred, gt, mask, weights)
    assert jnp.allclose(loss1, ref1, atol=1e-5, rtol=1e-5), (loss1, ref1)
    assert float(loss1) <= 1.0

    # Case 2: (N, H, W), H not a multiple of 8 and W not a multiple of 128 —
    # native-layout path with a single exact (H, W) block (no padding).
    N2, H2, W2 = 2, 20, 40
    pred2 = jax.nn.sigmoid(jax.random.normal(ks[4], (N2, H2, W2), jnp.float32))
    gt2 = (jax.random.uniform(ks[5], (N2, H2, W2)) > 0.5).astype(jnp.float32)
    mask2 = (jax.random.uniform(ks[6], (N2, H2, W2)) > 0.2).astype(jnp.float32)

    loss2 = jax.block_until_ready(dice_loss(pred2, gt2, mask2))
    ref2 = _ref_dice_loss(pred2, gt2, mask2)
    assert jnp.allclose(loss2, ref2, atol=1e-5, rtol=1e-5), (loss2, ref2)
    assert float(loss2) <= 1.0

    # Case 3: multi-tile accumulation along H with a partial last tile
    # (72 % 16 == 8) — exercises the in-kernel tail row mask and the
    # resident per-batch accumulator across 5 grid steps.
    N3, H3, W3 = 2, 72, 128
    pred3 = jax.nn.sigmoid(jax.random.normal(ks[7], (N3, H3, W3), jnp.float32))
    gt3 = (jax.random.uniform(ks[8], (N3, H3, W3)) > 0.5).astype(jnp.float32)
    mask3 = (jax.random.uniform(ks[9], (N3, H3, W3)) > 0.2).astype(jnp.float32)

    loss3 = jax.block_until_ready(dice_loss(pred3, gt3, mask3, max_block_rows=16))
    ref3 = _ref_dice_loss(pred3, gt3, mask3)
    assert jnp.allclose(loss3, ref3, atol=1e-5, rtol=1e-5), (loss3, ref3)
    assert float(loss3) <= 1.0

    print("KERNEL_OK")
</pallas_src>

<mosaic_0001>
module attributes {stable_mosaic.version = 11 : i64} {
  func.func @_dice_kernel_weighted(%arg0: i32, %arg1: i32, %arg2: memref<1x1x16x16xf32, #tpu.memory_space<vmem>>, %arg3: memref<1x1x16x16xbf16, #tpu.memory_space<vmem>>, %arg4: memref<1x16x16xbf16, #tpu.memory_space<vmem>>, %arg5: memref<1x16x16xf32, #tpu.memory_space<vmem>>, %arg6: memref<1x3x16xf32, #tpu.memory_space<vmem>>) attributes {dimension_semantics = [#tpu.dimension_semantics<parallel>, #tpu.dimension_semantics<arbitrary>], iteration_bounds = array<i64: 2, 1>, scalar_prefetch = 0 : i64, scratch_operands = 0 : i64, tpu.core_type = #tpu.core_type<tc>, window_params = [{transform_indices = @transform_0, window_bounds = array<i64: 1, 1, 16, 16>}, {transform_indices = @transform_1, window_bounds = array<i64: 1, 1, 16, 16>}, {transform_indices = @transform_2, window_bounds = array<i64: 1, 16, 16>}, {transform_indices = @transform_3, window_bounds = array<i64: 1, 16, 16>}, {transform_indices = @transform_4, window_bounds = array<i64: 1, 3, 16>}]} {
    %c0 = arith.constant 0 : index
    %c0_0 = arith.constant 0 : index
    %c0_1 = arith.constant 0 : index
    %0 = vector.load %arg4[%c0, %c0_0, %c0_1] : memref<1x16x16xbf16, #tpu.memory_space<vmem>>, vector<1x16x16xbf16>
    %1 = vector.shape_cast %0 : vector<1x16x16xbf16> to vector<16x16xbf16>
    %2 = arith.extf %1 : vector<16x16xbf16> to vector<16x16xf32>
    %c0_2 = arith.constant 0 : index
    %c0_3 = arith.constant 0 : index
    %c0_4 = arith.constant 0 : index
    %3 = vector.load %arg5[%c0_2, %c0_3, %c0_4] : memref<1x16x16xf32, #tpu.memory_space<vmem>>, vector<1x16x16xf32>
    %4 = vector.shape_cast %3 : vector<1x16x16xf32> to vector<16x16xf32>
    %5 = arith.mulf %2, %4 : vector<16x16xf32>
    %c0_5 = arith.constant 0 : index
    %c0_6 = arith.constant 0 : index
    %c0_7 = arith.constant 0 : index
    %c0_8 = arith.constant 0 : index
    %6 = vector.load %arg2[%c0_5, %c0_6, %c0_7, %c0_8] : memref<1x1x16x16xf32, #tpu.memory_space<vmem>>, vector<1x1x16x16xf32>
    %7 = vector.shape_cast %6 : vector<1x1x16x16xf32> to vector<16x16xf32>
    %c0_9 = arith.constant 0 : index
    %c0_10 = arith.constant 0 : index
    %c0_11 = arith.constant 0 : index
    %c0_12 = arith.constant 0 : index
    %8 = vector.load %arg3[%c0_9, %c0_10, %c0_11, %c0_12] : memref<1x1x16x16xbf16, #tpu.memory_space<vmem>>, vector<1x1x16x16xbf16>
    %9 = vector.shape_cast %8 : vector<1x1x16x16xbf16> to vector<16x16xbf16>
    %10 = arith.extf %9 : vector<16x16xbf16> to vector<16x16xf32>
    %c0_i32 = arith.constant 0 : i32
    %11 = arith.cmpi eq, %arg1, %c0_i32 : i32
    %12 = arith.extui %11 : i1 to i32
    %c0_i32_13 = arith.constant 0 : i32
    %13 = arith.cmpi ne, %12, %c0_i32_13 : i32
    scf.if %13 {
      %cst_32 = arith.constant 0.000000e+00 : f32
      %41 = vector.broadcast %cst_32 : f32 to vector<3x16xf32>
      %c0_33 = arith.constant 0 : index
      %c0_34 = arith.constant 0 : index
      %c0_35 = arith.constant 0 : index
      %42 = vector.load %arg6[%c0_33, %c0_34, %c0_35] : memref<1x3x16xf32, #tpu.memory_space<vmem>>, vector<1x3x16xf32>
      %43 = vector.shape_cast %42 : vector<1x3x16xf32> to vector<3x16xf32>
      %44 = vector.shape_cast %41 : vector<3x16xf32> to vector<1x3x16xf32>
      tpu.vector_store %arg6[%c0_33, %c0_34, %c0_35], %44 {strides = array<i32>} : memref<1x3x16xf32, #tpu.memory_space<vmem>>, vector<1x3x16xf32>,
    } else {
    }
    %14 = arith.mulf %7, %5 : vector<16x16xf32>
    %15 = arith.mulf %10, %5 : vector<16x16xf32>
    %c0_14 = arith.constant 0 : index
    %c0_15 = arith.constant 0 : index
    %c0_16 = arith.constant 0 : index
    %16 = vector.load %arg6[%c0_14, %c0_15, %c0_16] : memref<1x3x16xf32, #tpu.memory_space<vmem>>, vector<1x1x16xf32>
    %17 = vector.shape_cast %16 : vector<1x1x16xf32> to vector<1x16xf32>
    %18 = arith.mulf %14, %10 : vector<16x16xf32>
    %cst = arith.constant dense<0.000000e+00> : vector<16xf32>
    %19 = vector.multi_reduction <add>, %18, %cst [0] : vector<16x16xf32> to vector<16xf32>
    %20 = vector.shape_cast %19 : vector<16xf32> to vector<1x16xf32>
    %21 = arith.addf %17, %20 : vector<1x16xf32>
    %c0_17 = arith.constant 0 : index
    %c0_18 = arith.constant 0 : index
    %c0_19 = arith.constant 0 : index
    %22 = vector.load %arg6[%c0_17, %c0_18, %c0_19] : memref<1x3x16xf32, #tpu.memory_space<vmem>>, vector<1x1x16xf32>
    %23 = vector.shape_cast %22 : vector<1x1x16xf32> to vector<1x16xf32>
    %24 = vector.shape_cast %21 : vector<1x16xf32> to vector<1x1x16xf32>
    tpu.vector_store %arg6[%c0_17, %c0_18, %c0_19], %24 {strides = array<i32>} : memref<1x3x16xf32, #tpu.memory_space<vmem>>, vector<1x1x16xf32>,
    %c0_20 = arith.constant 0 : index
    %c1 = arith.constant 1 : index
    %c0_21 = arith.constant 0 : index
    %25 = vector.load %arg6[%c0_20, %c1, %c0_21] : memref<1x3x16xf32, #tpu.memory_space<vmem>>, vector<1x1x16xf32>
    %26 = vector.shape_cast %25 : vector<1x1x16xf32> to vector<1x16xf32>
    %cst_22 = arith.constant dense<0.000000e+00> : vector<16xf32>
    %27 = vector.multi_reduction <add>, %14, %cst_22 [0] : vector<16x16xf32> to vector<16xf32>
    %28 = vector.shape_cast %27 : vector<16xf32> to vector<1x16xf32>
    %29 = arith.addf %26, %28 : vector<1x16xf32>
    %c0_23 = arith.constant 0 : index
    %c1_24 = arith.constant 1 : index
    %c0_25 = arith.constant 0 : index
    %30 = vector.load %arg6[%c0_23, %c1_24, %c0_25] : memref<1x3x16xf32, #tpu.memory_space<vmem>>, vector<1x1x16xf32>
    %31 = vector.shape_cast %30 : vector<1x1x16xf32> to vector<1x16xf32>
    %32 = vector.shape_cast %29 : vector<1x16xf32> to vector<1x1x16xf32>
    tpu.vector_store %arg6[%c0_23, %c1_24, %c0_25], %32 {strides = array<i32>} : memref<1x3x16xf32, #tpu.memory_space<vmem>>, vector<1x1x16xf32>,
    %c0_26 = arith.constant 0 : index
    %c2 = arith.constant 2 : index
    %c0_27 = arith.constant 0 : index
    %33 = vector.load %arg6[%c0_26, %c2, %c0_27] : memref<1x3x16xf32, #tpu.memory_space<vmem>>, vector<1x1x16xf32>
    %34 = vector.shape_cast %33 : vector<1x1x16xf32> to vector<1x16xf32>
    %cst_28 = arith.constant dense<0.000000e+00> : vector<16xf32>
    %35 = vector.multi_reduction <add>, %15, %cst_28 [0] : vector<16x16xf32> to vector<16xf32>
    %36 = vector.shape_cast %35 : vector<16xf32> to vector<1x16xf32>
    %37 = arith.addf %34, %36 : vector<1x16xf32>
    %c0_29 = arith.constant 0 : index
    %c2_30 = arith.constant 2 : index
    %c0_31 = arith.constant 0 : index
    %38 = vector.load %arg6[%c0_29, %c2_30, %c0_31] : memref<1x3x16xf32, #tpu.memory_space<vmem>>, vector<1x1x16xf32>
    %39 = vector.shape_cast %38 : vector<1x1x16xf32> to vector<1x16xf32>
    %40 = vector.shape_cast %37 : vector<1x16xf32> to vector<1x1x16xf32>
    tpu.vector_store %arg6[%c0_29, %c2_30, %c0_31], %40 {strides = array<i32>} : memref<1x3x16xf32, #tpu.memory_space<vmem>>, vector<1x1x16xf32>,
    return
  }
  func.func @transform_0(%arg0: i32, %arg1: i32) -> (i32, i32, i32, i32) {
    %c0_i32 = arith.constant 0 : i32
    %c0_i32_0 = arith.constant 0 : i32
    %c0_i32_1 = arith.constant 0 : i32
    return %arg0, %c0_i32, %arg1, %c0_i32_0 : i32, i32, i32, i32
  }
  func.func @transform_1(%arg0: i32, %arg1: i32) -> (i32, i32, i32, i32) {
    %c0_i32 = arith.constant 0 : i32
    %c0_i32_0 = arith.constant 0 : i32
    %c0_i32_1 = arith.constant 0 : i32
    return %arg0, %c0_i32, %arg1, %c0_i32_0 : i32, i32, i32, i32
  }
  func.func @transform_2(%arg0: i32, %arg1: i32) -> (i32, i32, i32) {
    %c0_i32 = arith.constant 0 : i32
    %c0_i32_0 = arith.constant 0 : i32
    return %arg0, %arg1, %c0_i32 : i32, i32, i32
  }
  func.func @transform_3(%arg0: i32, %arg1: i32) -> (i32, i32, i32) {
    %c0_i32 = arith.constant 0 : i32
    %c0_i32_0 = arith.constant 0 : i32
    return %arg0, %arg1, %c0_i32 : i32, i32, i32
  }
  func.func @transform_4(%arg0: i32, %arg1: i32) -> (i32, i32, i32) {
    %c0_i32 = arith.constant 0 : i32
    %c0_i32_0 = arith.constant 0 : i32
    %c0_i32_1 = arith.constant 0 : i32
    return %arg0, %c0_i32, %c0_i32_0 : i32, i32, i32
  }
}

</mosaic_0001>

<llo_original>
// kernel: tpu_custom_call.1
$region0: #{tpu_custom_call.1}
  #allocation0 [shape = 'u32[]', space=smem, size = 0x4, offset = 0x4, fixed_abs, tag = 'smem constant byte address 0x4 - core index']
  #allocation1 [shape = 'u32[144,128]{1,0:T(1,128)}', space=vmem, size = 0x12000, scoped, tag = 'internal scratch']
  %s0 = inlined_call_operand.hbm [shape: f32[2,1,16,16], index: 0, kind: input, shape index: {}]
  %s1 = inlined_call_operand.hbm [shape: bf16[2,1,16,16], index: 1, kind: input, shape index: {}]
  %s2 = inlined_call_operand.hbm [shape: bf16[2,16,16], index: 2, kind: input, shape index: {}]
  %s3 = inlined_call_operand.hbm [shape: f32[2,16,16], index: 3, kind: input, shape index: {}]
  %s4 = inlined_call_operand.vmem [shape: f32[2,3,16], index: 4, kind: output, shape index: {}]
  %s5 = sld [smem:[#allocation0]]
  $region69: #{tpu_custom_call.1} parent=0
    _
  %s7 = ssub.s32 1, %s5
  %s8 = scalar_select 0, %s7, %s5
  $region1: #{tpu_custom_call.1} parent=0
    #allocation2 [shape = 'u8[16384]{0}', space=vmem, size = 0x4000, scoped, tag = 'input window, operand 0']
    #allocation3 [shape = 's32[2]{0}', space=sflag, size = 0x8, scoped, tag = 'scoped memory for tpu_custom_call.1']
    #allocation4 [shape = 'u8[8192]{0}', space=vmem, size = 0x2000, scoped, tag = 'input window, operand 1']
    #allocation5 [shape = 's32[2]{0}', space=sflag, size = 0x8, scoped, tag = 'scoped memory for tpu_custom_call.1']
    #allocation6 [shape = 'u8[8192]{0}', space=vmem, size = 0x2000, scoped, tag = 'input window, operand 2']
    #allocation7 [shape = 'u8[16384]{0}', space=vmem, size = 0x4000, scoped, tag = 'input window, operand 3']
    #allocation8 [shape = 's32[2]{0}', space=sflag, size = 0x8, scoped, tag = 'scoped memory for tpu_custom_call.1']
    %9 = vsyncpa [#allocation3], 0
    %s10 = scalar_lea.sflag [#allocation3], 1
    %11 = vsyncpa %s10, 0
    %12 = vsyncpa [#allocation5], 0
    %s13 = scalar_lea.sflag [#allocation5], 1
    %14 = vsyncpa %s13, 0
    %15 = vsyncpa [#allocation8], 0
    %s16 = scalar_lea.sflag [#allocation8], 1
    %17 = vsyncpa %s16, 0
    loop: start=0, step=1, limit=4
    $region2: #{tpu_custom_call.1} parent=1 // loop_pre_header
      _
    $region3: #{tpu_custom_call.1} parent=1 // loop_header
      %s19 = sphi 0, %s23
      %p20 = scmp.ge.s32.totalorder %s19, 4
      %s26 = sphi 0, %s38
      %s27 = sphi 0, %s34
      %s28 = sphi 0, %s26
      %s29 = sphi 0, %s27
      %s30 = sphi 0, %s28
      %s31 = sphi 0, %s29
      %s43 = sphi 0, %s45
      %s46 = sphi 0, %s43
      %s47 = sphi 0, %s46
      %s63 = sphi 0, %s47
      %s71 = sphi 0, %s73
      %s74 = sphi 0, %s71
      %s75 = sphi 0, %s74
      %s91 = sphi 0, %s75
      %s99 = sphi 0, %s101
      %s102 = sphi 0, %s99
      %s103 = sphi 0, %s102
      %s119 = sphi 0, %s103
      %s127 = sphi 0, %s129
      %s130 = sphi 0, %s127
      %s131 = sphi 0, %s130
      %s147 = sphi 0, %s131
      %s153 = sphi 0, %s155
      %s156 = sphi 0, %s153
      %s157 = sphi 0, %s156
      %s173 = sphi 0, %s157
    $region4: #{tpu_custom_call.1} parent=1 // loop_header_branch
      %22 = sbr.rel (%p20) target = $region8
    $region5: #{tpu_custom_call.1} parent=1 // loop_body
      %s24 = ssub.s32 %s19, 1
      %s25 = ssub.s32 %s19, 2
      %s32 = sadd.s32 1, %s27
      %p33 = scmp.ge.s32.totalorder %s32, 1
      %s34 = scalar_select %p33, 0, %s32
      %s35 = sadd.s32 1, %s26
      %s36 = scalar_select %p33, %s35, %s26
      %p37 = scmp.ge.s32.totalorder %s36, 2
      %s38 = scalar_select %p37, 0, %s36
      %s39 = ssub.s32 %s26, %s38
      %s40 = ssub.s32 %s27, %s34
      %s41 = sor.u32 %s39, %s40
      %p42 = scmp.eq.s32.totalorder %s41, 0
      %s44 = sadd.s32 %s43, 1
      %s45 = scalar_select %p42, %s43, %s44
      %p48 = pneg %p42
      %p49 = scmp.eq.s32.totalorder %s19, 1
      %p50 = por %p48, %p49
      %p51 = scmp.ne.s32.totalorder %s43, %s46
      %p52 = scmp.eq.s32.totalorder %s19, 0
      %p53 = por %p51, %p52
      %p54 = scmp.ne.s32.totalorder %s43, %s46
      %p55 = scmp.eq.s32.totalorder %s24, 1
      %p56 = por %p54, %p55
      %p57 = scmp.ne.s32.totalorder %s46, %s47
      %p58 = scmp.eq.s32.totalorder %s24, 0
      %p59 = por %p57, %p58
      %p60 = scmp.ne.s32.totalorder %s46, %s47
      %p61 = scmp.eq.s32.totalorder %s25, 1
      %p62 = por %p60, %p61
      %p64 = scmp.ne.s32.totalorder %s47, %s63
      %p65 = scmp.eq.s32.totalorder %s25, 0
      %p66 = por %p64, %p65
      %s67 = ssub.s32 %s26, %s38
      %s68 = ssub.s32 %s27, %s34
      %s69 = sor.u32 %s67, %s68
      %p70 = scmp.eq.s32.totalorder %s69, 0
      %s72 = sadd.s32 %s71, 1
      %s73 = scalar_select %p70, %s71, %s72
      %p76 = pneg %p70
      %p77 = scmp.eq.s32.totalorder %s19, 1
      %p78 = por %p76, %p77
      %p79 = scmp.ne.s32.totalorder %s71, %s74
      %p80 = scmp.eq.s32.totalorder %s19, 0
      %p81 = por %p79, %p80
      %p82 = scmp.ne.s32.totalorder %s71, %s74
      %p83 = scmp.eq.s32.totalorder %s24, 1
      %p84 = por %p82, %p83
      %p85 = scmp.ne.s32.totalorder %s74, %s75
      %p86 = scmp.eq.s32.totalorder %s24, 0
      %p87 = por %p85, %p86
      %p88 = scmp.ne.s32.totalorder %s74, %s75
      %p89 = scmp.eq.s32.totalorder %s25, 1
      %p90 = por %p88, %p89
      %p92 = scmp.ne.s32.totalorder %s75, %s91
      %p93 = scmp.eq.s32.totalorder %s25, 0
      %p94 = por %p92, %p93
      %s95 = ssub.s32 %s26, %s38
      %s96 = ssub.s32 %s27, %s34
      %s97 = sor.u32 %s95, %s96
      %p98 = scmp.eq.s32.totalorder %s97, 0
      %s100 = sadd.s32 %s99, 1
      %s101 = scalar_select %p98, %s99, %s100
      %p104 = pneg %p98
      %p105 = scmp.eq.s32.totalorder %s19, 1
      %p106 = por %p104, %p105
      %p107 = scmp.ne.s32.totalorder %s99, %s102
      %p108 = scmp.eq.s32.totalorder %s19, 0
      %p109 = por %p107, %p108
      %p110 = scmp.ne.s32.totalorder %s99, %s102
      %p111 = scmp.eq.s32.totalorder %s24, 1
      %p112 = por %p110, %p111
      %p113 = scmp.ne.s32.totalorder %s102, %s103
      %p114 = scmp.eq.s32.totalorder %s24, 0
      %p115 = por %p113, %p114
      %p116 = scmp.ne.s32.totalorder %s102, %s103
      %p117 = scmp.eq.s32.totalorder %s25, 1
      %p118 = por %p116, %p117
      %p120 = scmp.ne.s32.totalorder %s103, %s119
      %p121 = scmp.eq.s32.totalorder %s25, 0
      %p122 = por %p120, %p121
      %s123 = ssub.s32 %s26, %s38
      %s124 = ssub.s32 %s27, %s34
      %s125 = sor.u32 %s123, %s124
      %p126 = scmp.eq.s32.totalorder %s125, 0
      %s128 = sadd.s32 %s127, 1
      %s129 = scalar_select %p126, %s127, %s128
      %p132 = pneg %p126
      %p133 = scmp.eq.s32.totalorder %s19, 1
      %p134 = por %p132, %p133
      %p135 = scmp.ne.s32.totalorder %s127, %s130
      %p136 = scmp.eq.s32.totalorder %s19, 0
      %p137 = por %p135, %p136
      %p138 = scmp.ne.s32.totalorder %s127, %s130
      %p139 = scmp.eq.s32.totalorder %s24, 1
      %p140 = por %p138, %p139
      %p141 = scmp.ne.s32.totalorder %s130, %s131
      %p142 = scmp.eq.s32.totalorder %s24, 0
      %p143 = por %p141, %p142
      %p144 = scmp.ne.s32.totalorder %s130, %s131
      %p145 = scmp.eq.s32.totalorder %s25, 1
      %p146 = por %p144, %p145
      %p148 = scmp.ne.s32.totalorder %s131, %s147
      %p149 = scmp.eq.s32.totalorder %s25, 0
      %p150 = por %p148, %p149
      %s151 = ssub.s32 %s26, %s38
      %p152 = scmp.eq.s32.totalorder %s151, 0
      %s154 = sadd.s32 %s153, 1
      %s155 = scalar_select %p152, %s153, %s154
      %p158 = pneg %p152
      %p159 = scmp.eq.s32.totalorder %s19, 1
      %p160 = por %p158, %p159
      %p161 = scmp.ne.s32.totalorder %s153, %s156
      %p162 = scmp.eq.s32.totalorder %s19, 0
      %p163 = por %p161, %p162
      %p164 = scmp.ne.s32.totalorder %s153, %s156
      %p165 = scmp.eq.s32.totalorder %s24, 1
      %p166 = por %p164, %p165
      %p167 = scmp.ne.s32.totalorder %s156, %s157
      %p168 = scmp.eq.s32.totalorder %s24, 0
      %p169 = por %p167, %p168
      %p170 = scmp.ne.s32.totalorder %s156, %s157
      %p171 = scmp.eq.s32.totalorder %s25, 1
      %p172 = por %p170, %p171
      %p174 = scmp.ne.s32.totalorder %s157, %s173
      %p175 = scmp.eq.s32.totalorder %s25, 0
      %p176 = por %p174, %p175
      %p177 = scmp.le.s32.totalorder 1, %s19
      %p178 = scmp.lt.s32.totalorder %s19, 3
      %p179 = pnand %p177, %p178
      %p180 = pneg %p179
      // Predicated region
      $region9: #{tpu_custom_call.1} parent=5 // pred_check
        _
      $region10: #{tpu_custom_call.1} parent=5 // pred_check_branch
        %182 = sbr.rel (%p179) target = $region12
      $region11: #{tpu_custom_call.1} parent=5 // pred_region
        %s183 = ssub.s32 %s19, 1
      $region12: #{tpu_custom_call.1} parent=5 // pred_fallthru
        _
      %p184 = scmp.lt.s32.totalorder %s19, 2
      // Predicated region
      $region13: #{tpu_custom_call.1} parent=5 // pred_check
        %p185 = pneg %p184
      $region14: #{tpu_custom_call.1} parent=5 // pred_check_branch
        %187 = sbr.rel (%p185) target = $region16
      $region15: #{tpu_custom_call.1} parent=5 // pred_region
        // Predicated region
        $region17: #{tpu_custom_call.1} parent=15 // pred_check
          %p188 = pneg %p53
        $region18: #{tpu_custom_call.1} parent=15 // pred_check_branch
          %190 = sbr.rel (%p188) target = $region20
        $region19: #{tpu_custom_call.1} parent=15 // pred_region
          %s191 = sand.u32 %s43, 1
          %s192 = scalar_lea.sflag [#allocation3], %s191
          %s193 = sand.u32 %s43, 1
          %s194 = smul.addr %s193, 16
          %s195 = scalar_lea.vmem [#allocation2], %s194
          %s196 = smul.u32 2, %s27
          %s198 = ssub.s32 256, 256
          %199 = vsyncadd %s192, %s198
          %s200 = smul.addr %s26, 2
          %s201 = sadd.s32 %s196, %s200
          %s202 = smul.addr %s201, 128
          %s203 = scalar_lea.hbm %s0, %s202
          %s204 = sshll.u32 %s195, 4
          %s205 = int_to_ptr.vmem [resolvable:$true] %s204
          %210 = dma.hbm_to_vmem [thread:$0]  %s203, 256, %s205, %s192, 128, 128, 8
        $region20: #{tpu_custom_call.1} parent=15 // pred_fallthru
          _
        // Predicated region
        $region21: #{tpu_custom_call.1} parent=15 // pred_check
          %p211 = pneg %p81
        $region22: #{tpu_custom_call.1} parent=15 // pred_check_branch
          %213 = sbr.rel (%p211) target = $region24
        $region23: #{tpu_custom_call.1} parent=15 // pred_region
          %s214 = sand.u32 %s19, 1
          %s215 = scalar_lea.sflag [#allocation5], %s214
          %s216 = sand.u32 %s71, 1
          %s217 = smul.addr %s216, 8
          %s218 = scalar_lea.vmem [#allocation4], %s217
          %s219 = smul.u32 2, %s27
          %s221 = ssub.s32 128, 128
          %222 = vsyncadd %s215, %s221
          %s223 = smul.addr %s26, 2
          %s224 = sadd.s32 %s219, %s223
          %s225 = smul.addr %s224, 64
          %s226 = scalar_lea.hbm %s1, %s225
          %s227 = sshll.u32 %s218, 4
          %s228 = int_to_ptr.vmem [resolvable:$true] %s227
          %233 = dma.hbm_to_vmem [thread:$0]  %s226, 128, %s228, %s215, 64, 64, 4
        $region24: #{tpu_custom_call.1} parent=15 // pred_fallthru
          _
        // Predicated region
        $region25: #{tpu_custom_call.1} parent=15 // pred_check
          %p234 = pneg %p109
        $region26: #{tpu_custom_call.1} parent=15 // pred_check_branch
          %236 = sbr.rel (%p234) target = $region28
        $region27: #{tpu_custom_call.1} parent=15 // pred_region
          %s237 = sand.u32 %s19, 1
          %s238 = scalar_lea.sflag [#allocation5], %s237
          %s239 = sand.u32 %s99, 1
          %s240 = smul.addr %s239, 8
          %s241 = scalar_lea.vmem [#allocation6], %s240
          %s242 = smul.u32 2, %s27
          %s244 = ssub.s32 128, 128
          %245 = vsyncadd %s238, %s244
          %s246 = smul.addr %s26, 2
          %s247 = sadd.s32 %s242, %s246
          %s248 = smul.addr %s247, 64
          %s249 = scalar_lea.hbm %s2, %s248
          %s250 = sshll.u32 %s241, 4
          %s251 = int_to_ptr.vmem [resolvable:$true] %s250
          %256 = dma.hbm_to_vmem [thread:$0]  %s249, 128, %s251, %s238, 64, 64, 4
        $region28: #{tpu_custom_call.1} parent=15 // pred_fallthru
          _
        // Predicated region
        $region29: #{tpu_custom_call.1} parent=15 // pred_check
          %p257 = pneg %p137
        $region30: #{tpu_custom_call.1} parent=15 // pred_check_branch
          %259 = sbr.rel (%p257) target = $region32
        $region31: #{tpu_custom_call.1} parent=15 // pred_region
          %s260 = sand.u32 %s127, 1
          %s261 = scalar_lea.sflag [#allocation8], %s260
          %s262 = sand.u32 %s127, 1
          %s263 = smul.addr %s262, 16
          %s264 = scalar_lea.vmem [#allocation7], %s263
          %s265 = smul.u32 2, %s27
          %s267 = ssub.s32 256, 256
          %268 = vsyncadd %s261, %s267
          %s269 = smul.addr %s26, 2
          %s270 = sadd.s32 %s265, %s269
          %s271 = smul.addr %s270, 128
          %s272 = scalar_lea.hbm %s3, %s271
          %s273 = sshll.u32 %s264, 4
          %s274 = int_to_ptr.vmem [resolvable:$true] %s273
          %279 = dma.hbm_to_vmem [thread:$0]  %s272, 256, %s274, %s261, 128, 128, 8
        $region32: #{tpu_custom_call.1} parent=15 // pred_fallthru
          _
      $region16: #{tpu_custom_call.1} parent=5 // pred_fallthru
        _
      %p280 = scmp.le.s32.totalorder 1, %s19
      %p281 = scmp.lt.s32.totalorder %s19, 3
      %p282 = pnand %p280, %p281
      %p283 = pneg %p282
      // Predicated region
      $region33: #{tpu_custom_call.1} parent=5 // pred_check
        _
      $region34: #{tpu_custom_call.1} parent=5 // pred_check_branch
        %285 = sbr.rel (%p282) target = $region36
      $region35: #{tpu_custom_call.1} parent=5 // pred_region
        %s286 = ssub.s32 %s19, 1
        %s287 = sand.u32 %s46, 1
        %s288 = scalar_lea.sflag [#allocation3], %s287
        %s289 = sand.u32 %s46, 1
        %s290 = smul.addr %s289, 16
        %s291 = scalar_lea.vmem [#allocation2], %s290
        // Predicated region
        $region37: #{tpu_custom_call.1} parent=35 // pred_check
          %p292 = pneg %p59
        $region38: #{tpu_custom_call.1} parent=35 // pred_check_branch
          %294 = sbr.rel (%p292) target = $region40
        $region39: #{tpu_custom_call.1} parent=35 // pred_region
          %295 = dma.done %s288, 256
        $region40: #{tpu_custom_call.1} parent=35 // pred_fallthru
          _
        %s296 = sand.u32 %s24, 1
        %s297 = scalar_lea.sflag [#allocation5], %s296
        %s298 = sand.u32 %s74, 1
        %s299 = smul.addr %s298, 8
        %s300 = scalar_lea.vmem [#allocation4], %s299
        // Predicated region
        $region41: #{tpu_custom_call.1} parent=35 // pred_check
          %p301 = pneg %p87
        $region42: #{tpu_custom_call.1} parent=35 // pred_check_branch
          %303 = sbr.rel (%p301) target = $region44
        $region43: #{tpu_custom_call.1} parent=35 // pred_region
          %304 = dma.done %s297, 128
        $region44: #{tpu_custom_call.1} parent=35 // pred_fallthru
          _
        %s305 = sand.u32 %s24, 1
        %s306 = scalar_lea.sflag [#allocation5], %s305
        %s307 = sand.u32 %s102, 1
        %s308 = smul.addr %s307, 8
        %s309 = scalar_lea.vmem [#allocation6], %s308
        // Predicated region
        $region45: #{tpu_custom_call.1} parent=35 // pred_check
          %p310 = pneg %p115
        $region46: #{tpu_custom_call.1} parent=35 // pred_check_branch
          %312 = sbr.rel (%p310) target = $region48
        $region47: #{tpu_custom_call.1} parent=35 // pred_region
          %313 = dma.done %s306, 128
        $region48: #{tpu_custom_call.1} parent=35 // pred_fallthru
          _
        %s314 = sand.u32 %s130, 1
        %s315 = scalar_lea.sflag [#allocation8], %s314
        %s316 = sand.u32 %s130, 1
        %s317 = smul.addr %s316, 16
        %s318 = scalar_lea.vmem [#allocation7], %s317
        // Predicated region
        $region49: #{tpu_custom_call.1} parent=35 // pred_check
          %p319 = pneg %p143
        $region50: #{tpu_custom_call.1} parent=35 // pred_check_branch
          %321 = sbr.rel (%p319) target = $region52
        $region51: #{tpu_custom_call.1} parent=35 // pred_region
          %322 = dma.done %s315, 256
        $region52: #{tpu_custom_call.1} parent=35 // pred_fallthru
          _
        %s323 = sand.u32 %s46, 1
        %s324 = scalar_lea.sflag [#allocation3], %s323
        %s325 = sand.u32 %s46, 1
        %s326 = smul.addr %s325, 16
        %s327 = scalar_lea.vmem [#allocation2], %s326
        %p328 = pneg %p59
        %p329 = pneg %p56
        %s330 = sand.u32 %s24, 1
        %s331 = scalar_lea.sflag [#allocation5], %s330
        %s332 = sand.u32 %s74, 1
        %s333 = smul.addr %s332, 8
        %s334 = scalar_lea.vmem [#allocation4], %s333
        %p335 = pneg %p87
        %p336 = pneg %p84
        %s337 = sand.u32 %s24, 1
        %s338 = scalar_lea.sflag [#allocation5], %s337
        %s339 = sand.u32 %s102, 1
        %s340 = smul.addr %s339, 8
        %s341 = scalar_lea.vmem [#allocation6], %s340
        %p342 = pneg %p115
        %p343 = pneg %p112
        %s344 = sand.u32 %s130, 1
        %s345 = scalar_lea.sflag [#allocation8], %s344
        %s346 = sand.u32 %s130, 1
        %s347 = smul.addr %s346, 16
        %s348 = scalar_lea.vmem [#allocation7], %s347
        %p349 = pneg %p143
        %p350 = pneg %p140
        %p351 = pneg %p169
        %p352 = pneg %p166
        %p353 = scmp.lt.s32.totalorder %s28, 1
        %s354 = scalar_select %p353, %s28, 1
        %s355 = smul.addr %s354, 4
        %s356 = scalar_lea.vmem %s4, %s355
        %s357 = smul.u32 2, %s29
        %s358 = smul.u32 2, %s29
        %s359 = smul.u32 2, %s29
        %s360 = smul.u32 2, %s29
        %p361 = scmp.lt.s32.totalorder %s28, 1
        %s362 = scalar_select %p361, %s28, 1
        %s363 = smul.addr %s362, 4
        %s364 = scalar_lea.vmem %s4, %s363
        %v365 = vld [vmem:[%s309] sm:$0xf]
        %v366 = vld [vmem:[%s309 + $0x4] sm:$0xf]
        %v367 = vunpack.c.l.bf16 %v365
        %v368 = vunpack.c.l.bf16 %v366
        %v369 = vld [vmem:[%s318] sm:$0xff]
        %v370 = vld [vmem:[%s318 + $0x8] sm:$0xff]
        %v371 = vmul.f32 %v367, %v369
        %v372 = vmul.f32 %v368, %v370
        %v373 = vld [vmem:[%s291] sm:$0xff]
        %v374 = vld [vmem:[%s291 + $0x8] sm:$0xff]
        %v375 = vld [vmem:[%s300] sm:$0xf]
        %v376 = vld [vmem:[%s300 + $0x4] sm:$0xf]
        %v377 = vunpack.c.l.bf16 %v375
        %v378 = vunpack.c.l.bf16 %v376
        %p379 = scmp.eq.s32.totalorder %s29, 0
        // Predicated region
        $region53: #{tpu_custom_call.1} parent=35 // pred_check
          %p380 = pneg %p379
        $region54: #{tpu_custom_call.1} parent=35 // pred_check_branch
          %382 = sbr.rel (%p380) target = $region56
        $region55: #{tpu_custom_call.1} parent=35 // pred_region
          %vm383 = vcmask 124928
          %384 = vst.msk [vmem:[%s364] sm:$0x7] %vm383, 0.0
        $region56: #{tpu_custom_call.1} parent=35 // pred_fallthru
          _
        %v385 = vmul.f32 %v373, %v371
        %v386 = vmul.f32 %v374, %v372
        %v387 = vmul.f32 %v377, %v371
        %v388 = vmul.f32 %v378, %v372
        %v389 = vld [vmem:[%s364] sm:$0x1]
        %v390 = vmul.f32 %v385, %v377
        %v391 = vmul.f32 %v386, %v378
        %vm392 = vcmask 130048
        %v393 = vsel %vm392, %v390, 0.0
        %v394 = vsel %vm392, %v391, 0.0
        %v395 = vadd.f32 %v393, %v394
        %v396 = vrot.slane %v395, 4
        %v397 = vadd.f32 %v395, %v396
        %v398 = vrot.slane %v397, 2
        %v399 = vadd.f32 %v397, %v398
        %v400 = vrot.slane %v399, 1
        %v401 = vadd.f32 %v399, %v400
        %v402 = vadd.f32 %v389, %v401
        %vm403 = vcmask 122880
        %404 = vst.msk [vmem:[%s364] sm:$0x1] %vm403, %v402
        %v405 = vld [vmem:[%s364 + $0x1] sm:$0x1]
        %v406 = vsel %vm392, %v385, 0.0
        %v407 = vsel %vm392, %v386, 0.0
        %v408 = vadd.f32 %v406, %v407
        %v409 = vrot.slane %v408, 4
        %v410 = vadd.f32 %v408, %v409
        %v411 = vrot.slane %v410, 2
        %v412 = vadd.f32 %v410, %v411
        %v413 = vrot.slane %v412, 1
        %v414 = vadd.f32 %v412, %v413
        %v415 = vadd.f32 %v405, %v414
        %416 = vst.msk [vmem:[%s364 + $0x1] sm:$0x1] %vm403, %v415
        %v417 = vld [vmem:[%s364 + $0x2] sm:$0x1]
        %v418 = vsel %vm392, %v387, 0.0
        %v419 = vsel %vm392, %v388, 0.0
        %v420 = vadd.f32 %v418, %v419
        %v421 = vrot.slane %v420, 4
        %v422 = vadd.f32 %v420, %v421
        %v423 = vrot.slane %v422, 2
        %v424 = vadd.f32 %v422, %v423
        %v425 = vrot.slane %v424, 1
        %v426 = vadd.f32 %v424, %v425
        %v427 = vadd.f32 %v417, %v426
        %428 = vst.msk [vmem:[%s364 + $0x2] sm:$0x1] %vm403, %v427
        %p429 = scmp.lt.s32.totalorder %s28, 1
        %s430 = scalar_select %p429, %s28, 1
        %s431 = smul.addr %s430, 4
        %s432 = scalar_lea.vmem %s4, %s431
        // Predicated region
        $region57: #{tpu_custom_call.1} parent=35 // pred_check
          %p433 = pneg %p166
        $region58: #{tpu_custom_call.1} parent=35 // pred_check_branch
          %435 = sbr.rel (%p433) target = $region60
        $region59: #{tpu_custom_call.1} parent=35 // pred_region
          _
        $region60: #{tpu_custom_call.1} parent=35 // pred_fallthru
          _
      $region36: #{tpu_custom_call.1} parent=5 // pred_fallthru
        _
      %p436 = scmp.le.s32.totalorder 2, %s19
      // Predicated region
      $region61: #{tpu_custom_call.1} parent=5 // pred_check
        %p437 = pneg %p436
      $region62: #{tpu_custom_call.1} parent=5 // pred_check_branch
        %439 = sbr.rel (%p437) target = $region64
      $region63: #{tpu_custom_call.1} parent=5 // pred_region
        %s440 = ssub.s32 %s19, 2
        // Predicated region
        $region65: #{tpu_custom_call.1} parent=63 // pred_check
          %p441 = pneg %p172
        $region66: #{tpu_custom_call.1} parent=63 // pred_check_branch
          %443 = sbr.rel (%p441) target = $region68
        $region67: #{tpu_custom_call.1} parent=63 // pred_region
          %p444 = scmp.lt.s32.totalorder %s30, 1
          %s445 = scalar_select %p444, %s30, 1
          %s446 = smul.addr %s445, 4
          %s447 = scalar_lea.vmem %s4, %s446
        $region68: #{tpu_custom_call.1} parent=63 // pred_fallthru
          _
      $region64: #{tpu_custom_call.1} parent=5 // pred_fallthru
        _
    $region6: #{tpu_custom_call.1} parent=1 // loop_footer
      %s23 = sadd.s32 1, %s19
    $region7: #{tpu_custom_call.1} parent=1 // loop_footer_branch
      %18 = sbr.rel target = $region3
    $region8: #{tpu_custom_call.1} parent=1 // loop_exit
      _
    %448 = vsyncpa [#allocation3], 1
    %s449 = scalar_lea.sflag [#allocation3], 1
    %450 = vsyncpa %s449, 1
    %451 = vsyncpa [#allocation5], 1
    %s452 = scalar_lea.sflag [#allocation5], 1
    %453 = vsyncpa %s452, 1
    %454 = vsyncpa [#allocation8], 1
    %s455 = scalar_lea.sflag [#allocation8], 1
    %456 = vsyncpa %s455, 1

</llo_original>
